<compile_context>
chip_gen: v7x
topology: tpu7x:2x2x1
jax: 0.10.0
libtpu: 0.0.40
codegen_flags: <defaults>
</compile_context>

<pallas_src>
import jax
import jax.numpy as jnp
from jax.experimental import pallas as pl
from jax.experimental.pallas import tpu as pltpu


IN_DIM = 64 * 8 * 4      # 2048
HIDDEN = 100
NEG_SLOPE = 0.01         # F.leaky_relu default negative_slope
MAX_BATCH_TILE = 512     # keeps 2x double-buffered x-block + weights well under
                         # the 16 MiB (v5e) / 32 MiB (v6e, v7x) scoped VMEM default


def _round_up(x, m):
    return ((x + m - 1) // m) * m


def _domain_classifier_kernel(x_ref, w1_ref, b1_ref, w2_ref, b2_ref, out_ref):
    # GradReverse: identity on the forward pass (only flips gradient sign).
    x = x_ref[...]                                                 # (TB, 2048)

    # fc1: (TB, 2048) @ (2048, 128) + (1, 128)   [hidden zero-padded 100->128]
    h = jnp.dot(x, w1_ref[...], preferred_element_type=jnp.float32) + b1_ref[...]

    # Dropout2d(0.5): identity in eval mode.
    # TODO(synk): training-mode Dropout2d (random channel zeroing + 2x scale) not implemented.

    # leaky_relu, slope 0.01
    h = jnp.where(h > 0, h, NEG_SLOPE * h)

    # fc2: (TB, 128) @ (128, C_pad) + (1, C_pad)  [padded hidden rows of w2 are zero]
    y = jnp.dot(h, w2_ref[...], preferred_element_type=jnp.float32) + b2_ref[...]
    out_ref[...] = y.astype(out_ref.dtype)


def domain_classifier_forward(x, w1, b1, w2, b2):
    """x: (B, 2048) f32; w1: (2048, 100); b1: (1, 100); w2: (100, C); b2: (1, C)."""
    B, in_dim = x.shape
    hidden = w1.shape[1]
    cls_num = w2.shape[1]

    # Lane-aligned padded sizes.
    h_pad = _round_up(hidden, 128)                 # 100 -> 128
    c_pad = _round_up(cls_num, 128)                # 4   -> 128 (lane-dense output)

    # Batch tiling: sublane-aligned tile, capped so the pipeline fits VMEM.
    b8 = _round_up(B, 8)
    tb = b8 if b8 <= MAX_BATCH_TILE else MAX_BATCH_TILE
    b_pad = _round_up(b8, tb)

    # Zero-pad operands (outside the kernel; math is unchanged).
    xp = jnp.pad(x, ((0, b_pad - B), (0, 0)))
    w1p = jnp.pad(w1, ((0, 0), (0, h_pad - hidden)))
    b1p = jnp.pad(b1, ((0, 0), (0, h_pad - hidden)))
    w2p = jnp.pad(w2, ((0, h_pad - hidden), (0, c_pad - cls_num)))
    b2p = jnp.pad(b2, ((0, 0), (0, c_pad - cls_num)))

    grid = (b_pad // tb,)

    out_padded = pl.pallas_call(
        _domain_classifier_kernel,
        out_shape=jax.ShapeDtypeStruct((b_pad, c_pad), jnp.float32),
        grid_spec=pltpu.PrefetchScalarGridSpec(
            num_scalar_prefetch=0,
            grid=grid,
            in_specs=[
                # x: tiled over batch.
                pl.BlockSpec((tb, in_dim), lambda i: (i, 0)),
                # Weights / biases: full-array blocks, resident across all steps.
                pl.BlockSpec((in_dim, h_pad), lambda i: (0, 0)),
                pl.BlockSpec((1, h_pad), lambda i: (0, 0)),
                pl.BlockSpec((h_pad, c_pad), lambda i: (0, 0)),
                pl.BlockSpec((1, c_pad), lambda i: (0, 0)),
            ],
            out_specs=pl.BlockSpec((tb, c_pad), lambda i: (i, 0)),
        ),
        compiler_params=pltpu.CompilerParams(
            dimension_semantics=("parallel",),   # megacore sharding on v7x
        ),
    )(xp, w1p, b1p, w2p, b2p)

    # Slice away batch / class padding.
    return out_padded[:B, :cls_num]


def _reference_forward(x, w1, b1, w2, b2):
    h = x @ w1 + b1
    h = jnp.where(h > 0, h, NEG_SLOPE * h)
    return h @ w2 + b2


if __name__ == "__main__":
    cls_num = 4
    B = 8

    key = jax.random.PRNGKey(0)
    kx, k1, kb1, k2, kb2 = jax.random.split(key, 5)

    # Deterministic synthetic parameters (shapes per the module __init__).
    x = jax.random.normal(kx, (B, IN_DIM), dtype=jnp.float32)
    w1 = jax.random.normal(k1, (IN_DIM, HIDDEN), dtype=jnp.float32) * 0.02
    b1 = jax.random.normal(kb1, (1, HIDDEN), dtype=jnp.float32) * 0.02
    w2 = jax.random.normal(k2, (HIDDEN, cls_num), dtype=jnp.float32) * 0.1
    b2 = jax.random.normal(kb2, (1, cls_num), dtype=jnp.float32) * 0.1

    out = domain_classifier_forward(x, w1, b1, w2, b2)
    out = jax.block_until_ready(out)

    ref = _reference_forward(x, w1, b1, w2, b2)
    assert out.shape == (B, cls_num), out.shape
    assert jnp.allclose(out, ref, atol=1e-4, rtol=1e-4), "mismatch vs reference"

    print("KERNEL_OK")
</pallas_src>

<mosaic_0001>
module attributes {stable_mosaic.version = 11 : i64} {
  func.func @_domain_classifier_kernel(%arg0: i32, %arg1: memref<8x2048xf32, #tpu.memory_space<vmem>>, %arg2: memref<2048x128xf32, #tpu.memory_space<vmem>>, %arg3: memref<1x128xf32, #tpu.memory_space<vmem>>, %arg4: memref<128x128xf32, #tpu.memory_space<vmem>>, %arg5: memref<1x128xf32, #tpu.memory_space<vmem>>, %arg6: memref<8x128xf32, #tpu.memory_space<vmem>>) attributes {dimension_semantics = [#tpu.dimension_semantics<parallel>], iteration_bounds = array<i64: 1>, scalar_prefetch = 0 : i64, scratch_operands = 0 : i64, tpu.core_type = #tpu.core_type<tc>, window_params = [{transform_indices = @transform_0, window_bounds = array<i64: 8, 2048>}, {pipeline_mode = #tpu.pipeline_mode<synchronous>, transform_indices = @transform_1, window_bounds = array<i64: 2048, 128>}, {pipeline_mode = #tpu.pipeline_mode<synchronous>, transform_indices = @transform_2, window_bounds = array<i64: 1, 128>}, {pipeline_mode = #tpu.pipeline_mode<synchronous>, transform_indices = @transform_3, window_bounds = array<i64: 128, 128>}, {pipeline_mode = #tpu.pipeline_mode<synchronous>, transform_indices = @transform_4, window_bounds = array<i64: 1, 128>}, {transform_indices = @transform_5, window_bounds = array<i64: 8, 128>}]} {
    %c0 = arith.constant 0 : index
    %c0_0 = arith.constant 0 : index
    %0 = vector.load %arg1[%c0, %c0_0] : memref<8x2048xf32, #tpu.memory_space<vmem>>, vector<8x2048xf32>
    %c0_1 = arith.constant 0 : index
    %c0_2 = arith.constant 0 : index
    %1 = vector.load %arg2[%c0_1, %c0_2] : memref<2048x128xf32, #tpu.memory_space<vmem>>, vector<2048x128xf32>
    %cst = arith.constant dense<0.000000e+00> : vector<8x128xf32>
    %2 = tpu.matmul %0, %1, %cst {dimension_numbers = #tpu.dot_dimension_numbers<[1], [0], [0], [1], [0, 0, 1, 1], [], []>} : vector<8x2048xf32>, vector<2048x128xf32>, vector<8x128xf32> -> vector<8x128xf32>
    %c0_3 = arith.constant 0 : index
    %c0_4 = arith.constant 0 : index
    %3 = vector.load %arg3[%c0_3, %c0_4] : memref<1x128xf32, #tpu.memory_space<vmem>>, vector<1x128xf32>
    %4 = vector.broadcast %3 : vector<1x128xf32> to vector<8x128xf32>
    %5 = arith.addf %2, %4 : vector<8x128xf32>
    %cst_5 = arith.constant 0.000000e+00 : f32
    %6 = vector.broadcast %cst_5 : f32 to vector<8x128xf32>
    %7 = arith.cmpf ogt, %5, %6 : vector<8x128xf32>
    %cst_6 = arith.constant 0.00999999977 : f32
    %8 = vector.broadcast %cst_6 : f32 to vector<8x128xf32>
    %9 = arith.mulf %8, %5 : vector<8x128xf32>
    %10 = arith.select %7, %5, %9 : vector<8x128xi1>, vector<8x128xf32>
    %c0_7 = arith.constant 0 : index
    %c0_8 = arith.constant 0 : index
    %11 = vector.load %arg4[%c0_7, %c0_8] : memref<128x128xf32, #tpu.memory_space<vmem>>, vector<128x128xf32>
    %cst_9 = arith.constant dense<0.000000e+00> : vector<8x128xf32>
    %12 = tpu.matmul %10, %11, %cst_9 {dimension_numbers = #tpu.dot_dimension_numbers<[1], [0], [0], [1], [0, 0, 1, 1], [], []>} : vector<8x128xf32>, vector<128x128xf32>, vector<8x128xf32> -> vector<8x128xf32>
    %c0_10 = arith.constant 0 : index
    %c0_11 = arith.constant 0 : index
    %13 = vector.load %arg5[%c0_10, %c0_11] : memref<1x128xf32, #tpu.memory_space<vmem>>, vector<1x128xf32>
    %14 = vector.broadcast %13 : vector<1x128xf32> to vector<8x128xf32>
    %15 = arith.addf %12, %14 : vector<8x128xf32>
    %c0_12 = arith.constant 0 : index
    %c0_13 = arith.constant 0 : index
    %16 = vector.load %arg6[%c0_12, %c0_13] : memref<8x128xf32, #tpu.memory_space<vmem>>, vector<8x128xf32>
    tpu.vector_store %arg6[%c0_12, %c0_13], %15 {strides = array<i32>} : memref<8x128xf32, #tpu.memory_space<vmem>>, vector<8x128xf32>,
    return
  }
  func.func @transform_0(%arg0: i32) -> (i32, i32) {
    %c0_i32 = arith.constant 0 : i32
    %c0_i32_0 = arith.constant 0 : i32
    return %arg0, %c0_i32 : i32, i32
  }
  func.func @transform_1(%arg0: i32) -> (i32, i32) {
    %c0_i32 = arith.constant 0 : i32
    %c0_i32_0 = arith.constant 0 : i32
    %c0_i32_1 = arith.constant 0 : i32
    return %c0_i32, %c0_i32_0 : i32, i32
  }
  func.func @transform_2(%arg0: i32) -> (i32, i32) {
    %c0_i32 = arith.constant 0 : i32
    %c0_i32_0 = arith.constant 0 : i32
    %c0_i32_1 = arith.constant 0 : i32
    return %c0_i32, %c0_i32_0 : i32, i32
  }
  func.func @transform_3(%arg0: i32) -> (i32, i32) {
    %c0_i32 = arith.constant 0 : i32
    %c0_i32_0 = arith.constant 0 : i32
    %c0_i32_1 = arith.constant 0 : i32
    return %c0_i32, %c0_i32_0 : i32, i32
  }
  func.func @transform_4(%arg0: i32) -> (i32, i32) {
    %c0_i32 = arith.constant 0 : i32
    %c0_i32_0 = arith.constant 0 : i32
    %c0_i32_1 = arith.constant 0 : i32
    return %c0_i32, %c0_i32_0 : i32, i32
  }
  func.func @transform_5(%arg0: i32) -> (i32, i32) {
    %c0_i32 = arith.constant 0 : i32
    %c0_i32_0 = arith.constant 0 : i32
    return %arg0, %c0_i32 : i32, i32
  }
}

</mosaic_0001>

<llo_original>
// kernel: tpu_custom_call.1
$region0: #{tpu_custom_call.1}
  #allocation0 [shape = 'u32[]', space=smem, size = 0x4, offset = 0x4, fixed_abs, tag = 'smem constant byte address 0x4 - core index']
  #allocation1 [shape = 'u32[144,128]{1,0:T(1,128)}', space=vmem, size = 0x12000, scoped, tag = 'internal scratch']
  %s0 = inlined_call_operand.hbm [shape: f32[8,2048], index: 0, kind: input, shape index: {}]
  %s1 = inlined_call_operand.hbm [shape: f32[2048,128], index: 1, kind: input, shape index: {}]
  %s2 = inlined_call_operand.vmem [shape: f32[1,128], index: 2, kind: input, shape index: {}]
  %s3 = inlined_call_operand.hbm [shape: f32[128,128], index: 3, kind: input, shape index: {}]
  %s4 = inlined_call_operand.vmem [shape: f32[1,128], index: 4, kind: input, shape index: {}]
  %s5 = inlined_call_operand.hbm [shape: f32[8,128], index: 5, kind: output, shape index: {}]
  %s6 = sld [smem:[#allocation0]]
  $region42: #{tpu_custom_call.1} parent=0
    _
  %s8 = ssub.s32 1, %s6
  %s9 = scalar_select 0, %s8, %s6
  $region1: #{tpu_custom_call.1} parent=0
    #allocation2 [shape = 'u8[65536]{0}', space=vmem, size = 0x10000, scoped, tag = 'input window, operand 0, single buffered']
    #allocation3 [shape = 's32[1]{0}', space=sflag, size = 0x4, scoped, tag = 'scoped memory for tpu_custom_call.1']
    #allocation4 [shape = 's32[1]{0}', space=sflag, size = 0x4, scoped, tag = 'scoped memory for tpu_custom_call.1']
    #allocation5 [shape = 'u8[1048576]{0}', space=vmem, size = 0x100000, scoped, tag = 'input window, operand 1, single buffered']
    #allocation6 [shape = 's32[1]{0}', space=sflag, size = 0x4, scoped, tag = 'scoped memory for tpu_custom_call.1']
    #allocation7 [shape = 'u8[65536]{0}', space=vmem, size = 0x10000, scoped, tag = 'input window, operand 3, single buffered']
    #allocation8 [shape = 'u8[4096]{0}', space=vmem, size = 0x1000, scoped, tag = 'output window, operand 0, single buffered']
    %10 = vsyncpa [#allocation3], 0
    %11 = vsyncpa [#allocation6], 0
    %12 = vsyncpa [#allocation4], 0
    // Predicated region
    $region2: #{tpu_custom_call.1} parent=1 // pred_check
      _
    $region3: #{tpu_custom_call.1} parent=1 // pred_check_branch
      %14 = sbr.rel (0) target = $region5
    $region4: #{tpu_custom_call.1} parent=1 // pred_region
      %s16 = ssub.s32 2048, 2048
      %17 = vsyncadd [#allocation3], %s16
      %s19 = sshll.u32 [#allocation2], 4
      %s20 = int_to_ptr.vmem [resolvable:$true] %s19
      %22 = dma.hbm_to_vmem [thread:$0]  %s0, 2048, %s20, [#allocation3]
    $region5: #{tpu_custom_call.1} parent=1 // pred_fallthru
      _
    // Predicated region
    $region6: #{tpu_custom_call.1} parent=1 // pred_check
      _
    $region7: #{tpu_custom_call.1} parent=1 // pred_check_branch
      %24 = sbr.rel (0) target = $region9
    $region8: #{tpu_custom_call.1} parent=1 // pred_region
      %s26 = ssub.s32 32768, 32768
      %27 = vsyncadd [#allocation6], %s26
      %s28 = sshll.u32 [#allocation5], 4
      %s29 = int_to_ptr.vmem [resolvable:$true] %s28
      %34 = dma.hbm_to_vmem [thread:$0]  %s1, 32768, %s29, [#allocation6], 128, 128, 8
    $region9: #{tpu_custom_call.1} parent=1 // pred_fallthru
      _
    // Predicated region
    $region10: #{tpu_custom_call.1} parent=1 // pred_check
      _
    $region11: #{tpu_custom_call.1} parent=1 // pred_check_branch
      %36 = sbr.rel (0) target = $region13
    $region12: #{tpu_custom_call.1} parent=1 // pred_region
      _
    $region13: #{tpu_custom_call.1} parent=1 // pred_fallthru
      _
    // Predicated region
    $region14: #{tpu_custom_call.1} parent=1 // pred_check
      _
    $region15: #{tpu_custom_call.1} parent=1 // pred_check_branch
      %38 = sbr.rel (0) target = $region17
    $region16: #{tpu_custom_call.1} parent=1 // pred_region
      %s40 = ssub.s32 2048, 2048
      %41 = vsyncadd [#allocation6], %s40
      %s42 = sshll.u32 [#allocation7], 4
      %s43 = int_to_ptr.vmem [resolvable:$true] %s42
      %48 = dma.hbm_to_vmem [thread:$0]  %s3, 2048, %s43, [#allocation6], 128, 128, 8
    $region17: #{tpu_custom_call.1} parent=1 // pred_fallthru
      _
    // Predicated region
    $region18: #{tpu_custom_call.1} parent=1 // pred_check
      _
    $region19: #{tpu_custom_call.1} parent=1 // pred_check_branch
      %50 = sbr.rel (0) target = $region21
    $region20: #{tpu_custom_call.1} parent=1 // pred_region
      _
    $region21: #{tpu_custom_call.1} parent=1 // pred_fallthru
      _
    // Predicated region
    $region22: #{tpu_custom_call.1} parent=1 // pred_check
      _
    $region23: #{tpu_custom_call.1} parent=1 // pred_check_branch
      %52 = sbr.rel (0) target = $region25
    $region24: #{tpu_custom_call.1} parent=1 // pred_region
      %53 = dma.done [#allocation3], 2048
    $region25: #{tpu_custom_call.1} parent=1 // pred_fallthru
      _
    // Predicated region
    $region26: #{tpu_custom_call.1} parent=1 // pred_check
      _
    $region27: #{tpu_custom_call.1} parent=1 // pred_check_branch
      %55 = sbr.rel (0) target = $region29
    $region28: #{tpu_custom_call.1} parent=1 // pred_region
      %56 = dma.done [#allocation6], 32768
    $region29: #{tpu_custom_call.1} parent=1 // pred_fallthru
      _
    // Predicated region
    $region30: #{tpu_custom_call.1} parent=1 // pred_check
      _
    $region31: #{tpu_custom_call.1} parent=1 // pred_check_branch
      %58 = sbr.rel (0) target = $region33
    $region32: #{tpu_custom_call.1} parent=1 // pred_region
      %59 = dma.done [#allocation6], 2048
    $region33: #{tpu_custom_call.1} parent=1 // pred_fallthru
      _
    %v60 = vld [vmem:[#allocation2] sm:$0xff]
    %v61 = vld [vmem:[#allocation2 + $0x8] sm:$0xff]
    %v62 = vld [vmem:[#allocation2 + $0x10] sm:$0xff]
    %v63 = vld [vmem:[#allocation2 + $0x18] sm:$0xff]
    %v64 = vld [vmem:[#allocation2 + $0x20] sm:$0xff]
    %v65 = vld [vmem:[#allocation2 + $0x28] sm:$0xff]
    %v66 = vld [vmem:[#allocation2 + $0x30] sm:$0xff]
    %v67 = vld [vmem:[#allocation2 + $0x38] sm:$0xff]
    %v68 = vld [vmem:[#allocation2 + $0x40] sm:$0xff]
    %v69 = vld [vmem:[#allocation2 + $0x48] sm:$0xff]
    %v70 = vld [vmem:[#allocation2 + $0x50] sm:$0xff]
    %v71 = vld [vmem:[#allocation2 + $0x58] sm:$0xff]
    %v72 = vld [vmem:[#allocation2 + $0x60] sm:$0xff]
    %v73 = vld [vmem:[#allocation2 + $0x68] sm:$0xff]
    %v74 = vld [vmem:[#allocation2 + $0x70] sm:$0xff]
    %v75 = vld [vmem:[#allocation2 + $0x78] sm:$0xff]
    %v76 = vld [vmem:[#allocation5] sm:$0xff]
    %v77 = vld [vmem:[#allocation5 + $0x8] sm:$0xff]
    %v78 = vld [vmem:[#allocation5 + $0x10] sm:$0xff]
    %v79 = vld [vmem:[#allocation5 + $0x18] sm:$0xff]
    %v80 = vld [vmem:[#allocation5 + $0x20] sm:$0xff]
    %v81 = vld [vmem:[#allocation5 + $0x28] sm:$0xff]
    %v82 = vld [vmem:[#allocation5 + $0x30] sm:$0xff]
    %v83 = vld [vmem:[#allocation5 + $0x38] sm:$0xff]
    %v84 = vld [vmem:[#allocation5 + $0x40] sm:$0xff]
    %v85 = vld [vmem:[#allocation5 + $0x48] sm:$0xff]
    %v86 = vld [vmem:[#allocation5 + $0x50] sm:$0xff]
    %v87 = vld [vmem:[#allocation5 + $0x58] sm:$0xff]
    %v88 = vld [vmem:[#allocation5 + $0x60] sm:$0xff]
    %v89 = vld [vmem:[#allocation5 + $0x68] sm:$0xff]
    %v90 = vld [vmem:[#allocation5 + $0x70] sm:$0xff]
    %v91 = vld [vmem:[#allocation5 + $0x78] sm:$0xff]
    %v92 = vld [vmem:[#allocation5 + $0x80] sm:$0xff]
    %v93 = vld [vmem:[#allocation5 + $0x88] sm:$0xff]
    %v94 = vld [vmem:[#allocation5 + $0x90] sm:$0xff]
    %v95 = vld [vmem:[#allocation5 + $0x98] sm:$0xff]
    %v96 = vld [vmem:[#allocation5 + $0xa0] sm:$0xff]
    %v97 = vld [vmem:[#allocation5 + $0xa8] sm:$0xff]
    %v98 = vld [vmem:[#allocation5 + $0xb0] sm:$0xff]
    %v99 = vld [vmem:[#allocation5 + $0xb8] sm:$0xff]
    %v100 = vld [vmem:[#allocation5 + $0xc0] sm:$0xff]
    %v101 = vld [vmem:[#allocation5 + $0xc8] sm:$0xff]
    %v102 = vld [vmem:[#allocation5 + $0xd0] sm:$0xff]
    %v103 = vld [vmem:[#allocation5 + $0xd8] sm:$0xff]
    %v104 = vld [vmem:[#allocation5 + $0xe0] sm:$0xff]
    %v105 = vld [vmem:[#allocation5 + $0xe8] sm:$0xff]
    %v106 = vld [vmem:[#allocation5 + $0xf0] sm:$0xff]
    %v107 = vld [vmem:[#allocation5 + $0xf8] sm:$0xff]
    %v108 = vld [vmem:[#allocation5 + $0x100] sm:$0xff]
    %v109 = vld [vmem:[#allocation5 + $0x108] sm:$0xff]
    %v110 = vld [vmem:[#allocation5 + $0x110] sm:$0xff]
    %v111 = vld [vmem:[#allocation5 + $0x118] sm:$0xff]
    %v112 = vld [vmem:[#allocation5 + $0x120] sm:$0xff]
    %v113 = vld [vmem:[#allocation5 + $0x128] sm:$0xff]
    %v114 = vld [vmem:[#allocation5 + $0x130] sm:$0xff]
    %v115 = vld [vmem:[#allocation5 + $0x138] sm:$0xff]
    %v116 = vld [vmem:[#allocation5 + $0x140] sm:$0xff]
    %v117 = vld [vmem:[#allocation5 + $0x148] sm:$0xff]
    %v118 = vld [vmem:[#allocation5 + $0x150] sm:$0xff]
    %v119 = vld [vmem:[#allocation5 + $0x158] sm:$0xff]
    %v120 = vld [vmem:[#allocation5 + $0x160] sm:$0xff]
    %v121 = vld [vmem:[#allocation5 + $0x168] sm:$0xff]
    %v122 = vld [vmem:[#allocation5 + $0x170] sm:$0xff]
    %v123 = vld [vmem:[#allocation5 + $0x178] sm:$0xff]
    %v124 = vld [vmem:[#allocation5 + $0x180] sm:$0xff]
    %v125 = vld [vmem:[#allocation5 + $0x188] sm:$0xff]
    %v126 = vld [vmem:[#allocation5 + $0x190] sm:$0xff]
    %v127 = vld [vmem:[#allocation5 + $0x198] sm:$0xff]
    %v128 = vld [vmem:[#allocation5 + $0x1a0] sm:$0xff]
    %v129 = vld [vmem:[#allocation5 + $0x1a8] sm:$0xff]
    %v130 = vld [vmem:[#allocation5 + $0x1b0] sm:$0xff]
    %v131 = vld [vmem:[#allocation5 + $0x1b8] sm:$0xff]
    %v132 = vld [vmem:[#allocation5 + $0x1c0] sm:$0xff]
    %v133 = vld [vmem:[#allocation5 + $0x1c8] sm:$0xff]
    %v134 = vld [vmem:[#allocation5 + $0x1d0] sm:$0xff]
    %v135 = vld [vmem:[#allocation5 + $0x1d8] sm:$0xff]
    %v136 = vld [vmem:[#allocation5 + $0x1e0] sm:$0xff]
    %v137 = vld [vmem:[#allocation5 + $0x1e8] sm:$0xff]
    %v138 = vld [vmem:[#allocation5 + $0x1f0] sm:$0xff]
    %v139 = vld [vmem:[#allocation5 + $0x1f8] sm:$0xff]
    %v140 = vld [vmem:[#allocation5 + $0x200] sm:$0xff]
    %v141 = vld [vmem:[#allocation5 + $0x208] sm:$0xff]
    %v142 = vld [vmem:[#allocation5 + $0x210] sm:$0xff]
    %v143 = vld [vmem:[#allocation5 + $0x218] sm:$0xff]
    %v144 = vld [vmem:[#allocation5 + $0x220] sm:$0xff]
    %v145 = vld [vmem:[#allocation5 + $0x228] sm:$0xff]
    %v146 = vld [vmem:[#allocation5 + $0x230] sm:$0xff]
    %v147 = vld [vmem:[#allocation5 + $0x238] sm:$0xff]
    %v148 = vld [vmem:[#allocation5 + $0x240] sm:$0xff]
    %v149 = vld [vmem:[#allocation5 + $0x248] sm:$0xff]
    %v150 = vld [vmem:[#allocation5 + $0x250] sm:$0xff]
    %v151 = vld [vmem:[#allocation5 + $0x258] sm:$0xff]
    %v152 = vld [vmem:[#allocation5 + $0x260] sm:$0xff]
    %v153 = vld [vmem:[#allocation5 + $0x268] sm:$0xff]
    %v154 = vld [vmem:[#allocation5 + $0x270] sm:$0xff]
    %v155 = vld [vmem:[#allocation5 + $0x278] sm:$0xff]
    %v156 = vld [vmem:[#allocation5 + $0x280] sm:$0xff]
    %v157 = vld [vmem:[#allocation5 + $0x288] sm:$0xff]
    %v158 = vld [vmem:[#allocation5 + $0x290] sm:$0xff]
    %v159 = vld [vmem:[#allocation5 + $0x298] sm:$0xff]
    %v160 = vld [vmem:[#allocation5 + $0x2a0] sm:$0xff]
    %v161 = vld [vmem:[#allocation5 + $0x2a8] sm:$0xff]
    %v162 = vld [vmem:[#allocation5 + $0x2b0] sm:$0xff]
    %v163 = vld [vmem:[#allocation5 + $0x2b8] sm:$0xff]
    %v164 = vld [vmem:[#allocation5 + $0x2c0] sm:$0xff]
    %v165 = vld [vmem:[#allocation5 + $0x2c8] sm:$0xff]
    %v166 = vld [vmem:[#allocation5 + $0x2d0] sm:$0xff]
    %v167 = vld [vmem:[#allocation5 + $0x2d8] sm:$0xff]
    %v168 = vld [vmem:[#allocation5 + $0x2e0] sm:$0xff]
    %v169 = vld [vmem:[#allocation5 + $0x2e8] sm:$0xff]
    %v170 = vld [vmem:[#allocation5 + $0x2f0] sm:$0xff]
    %v171 = vld [vmem:[#allocation5 + $0x2f8] sm:$0xff]
    %v172 = vld [vmem:[#allocation5 + $0x300] sm:$0xff]
    %v173 = vld [vmem:[#allocation5 + $0x308] sm:$0xff]
    %v174 = vld [vmem:[#allocation5 + $0x310] sm:$0xff]
    %v175 = vld [vmem:[#allocation5 + $0x318] sm:$0xff]
    %v176 = vld [vmem:[#allocation5 + $0x320] sm:$0xff]
    %v177 = vld [vmem:[#allocation5 + $0x328] sm:$0xff]
    %v178 = vld [vmem:[#allocation5 + $0x330] sm:$0xff]
    %v179 = vld [vmem:[#allocation5 + $0x338] sm:$0xff]
    %v180 = vld [vmem:[#allocation5 + $0x340] sm:$0xff]
    %v181 = vld [vmem:[#allocation5 + $0x348] sm:$0xff]
    %v182 = vld [vmem:[#allocation5 + $0x350] sm:$0xff]
    %v183 = vld [vmem:[#allocation5 + $0x358] sm:$0xff]
    %v184 = vld [vmem:[#allocation5 + $0x360] sm:$0xff]
    %v185 = vld [vmem:[#allocation5 + $0x368] sm:$0xff]
    %v186 = vld [vmem:[#allocation5 + $0x370] sm:$0xff]
    %v187 = vld [vmem:[#allocation5 + $0x378] sm:$0xff]
    %v188 = vld [vmem:[#allocation5 + $0x380] sm:$0xff]
    %v189 = vld [vmem:[#allocation5 + $0x388] sm:$0xff]
    %v190 = vld [vmem:[#allocation5 + $0x390] sm:$0xff]
    %v191 = vld [vmem:[#allocation5 + $0x398] sm:$0xff]
    %v192 = vld [vmem:[#allocation5 + $0x3a0] sm:$0xff]
    %v193 = vld [vmem:[#allocation5 + $0x3a8] sm:$0xff]
    %v194 = vld [vmem:[#allocation5 + $0x3b0] sm:$0xff]
    %v195 = vld [vmem:[#allocation5 + $0x3b8] sm:$0xff]
    %v196 = vld [vmem:[#allocation5 + $0x3c0] sm:$0xff]
    %v197 = vld [vmem:[#allocation5 + $0x3c8] sm:$0xff]
    %v198 = vld [vmem:[#allocation5 + $0x3d0] sm:$0xff]
    %v199 = vld [vmem:[#allocation5 + $0x3d8] sm:$0xff]
    %v200 = vld [vmem:[#allocation5 + $0x3e0] sm:$0xff]
    %v201 = vld [vmem:[#allocation5 + $0x3e8] sm:$0xff]
    %v202 = vld [vmem:[#allocation5 + $0x3f0] sm:$0xff]
    %v203 = vld [vmem:[#allocation5 + $0x3f8] sm:$0xff]
    %v204 = vld [vmem:[#allocation5 + $0x400] sm:$0xff]
    %v205 = vld [vmem:[#allocation5 + $0x408] sm:$0xff]
    %v206 = vld [vmem:[#allocation5 + $0x410] sm:$0xff]
    %v207 = vld [vmem:[#allocation5 + $0x418] sm:$0xff]
    %v208 = vld [vmem:[#allocation5 + $0x420] sm:$0xff]
    %v209 = vld [vmem:[#allocation5 + $0x428] sm:$0xff]
    %v210 = vld [vmem:[#allocation5 + $0x430] sm:$0xff]
    %v211 = vld [vmem:[#allocation5 + $0x438] sm:$0xff]
    %v212 = vld [vmem:[#allocation5 + $0x440] sm:$0xff]
    %v213 = vld [vmem:[#allocation5 + $0x448] sm:$0xff]
    %v214 = vld [vmem:[#allocation5 + $0x450] sm:$0xff]
    %v215 = vld [vmem:[#allocation5 + $0x458] sm:$0xff]
    %v216 = vld [vmem:[#allocation5 + $0x460] sm:$0xff]
    %v217 = vld [vmem:[#allocation5 + $0x468] sm:$0xff]
    %v218 = vld [vmem:[#allocation5 + $0x470] sm:$0xff]
    %v219 = vld [vmem:[#allocation5 + $0x478] sm:$0xff]
    %v220 = vld [vmem:[#allocation5 + $0x480] sm:$0xff]
    %v221 = vld [vmem:[#allocation5 + $0x488] sm:$0xff]
    %v222 = vld [vmem:[#allocation5 + $0x490] sm:$0xff]
    %v223 = vld [vmem:[#allocation5 + $0x498] sm:$0xff]
    %v224 = vld [vmem:[#allocation5 + $0x4a0] sm:$0xff]
    %v225 = vld [vmem:[#allocation5 + $0x4a8] sm:$0xff]
    %v226 = vld [vmem:[#allocation5 + $0x4b0] sm:$0xff]
    %v227 = vld [vmem:[#allocation5 + $0x4b8] sm:$0xff]
    %v228 = vld [vmem:[#allocation5 + $0x4c0] sm:$0xff]
    %v229 = vld [vmem:[#allocation5 + $0x4c8] sm:$0xff]
    %v230 = vld [vmem:[#allocation5 + $0x4d0] sm:$0xff]
    %v231 = vld [vmem:[#allocation5 + $0x4d8] sm:$0xff]
    %v232 = vld [vmem:[#allocation5 + $0x4e0] sm:$0xff]
    %v233 = vld [vmem:[#allocation5 + $0x4e8] sm:$0xff]
    %v234 = vld [vmem:[#allocation5 + $0x4f0] sm:$0xff]
    %v235 = vld [vmem:[#allocation5 + $0x4f8] sm:$0xff]
    %v236 = vld [vmem:[#allocation5 + $0x500] sm:$0xff]
    %v237 = vld [vmem:[#allocation5 + $0x508] sm:$0xff]
    %v238 = vld [vmem:[#allocation5 + $0x510] sm:$0xff]
    %v239 = vld [vmem:[#allocation5 + $0x518] sm:$0xff]
    %v240 = vld [vmem:[#allocation5 + $0x520] sm:$0xff]
    %v241 = vld [vmem:[#allocation5 + $0x528] sm:$0xff]
    %v242 = vld [vmem:[#allocation5 + $0x530] sm:$0xff]
    %v243 = vld [vmem:[#allocation5 + $0x538] sm:$0xff]
    %v244 = vld [vmem:[#allocation5 + $0x540] sm:$0xff]
    %v245 = vld [vmem:[#allocation5 + $0x548] sm:$0xff]
    %v246 = vld [vmem:[#allocation5 + $0x550] sm:$0xff]
    %v247 = vld [vmem:[#allocation5 + $0x558] sm:$0xff]
    %v248 = vld [vmem:[#allocation5 + $0x560] sm:$0xff]
    %v249 = vld [vmem:[#allocation5 + $0x568] sm:$0xff]
    %v250 = vld [vmem:[#allocation5 + $0x570] sm:$0xff]
    %v251 = vld [vmem:[#allocation5 + $0x578] sm:$0xff]
    %v252 = vld [vmem:[#allocation5 + $0x580] sm:$0xff]
    %v253 = vld [vmem:[#allocation5 + $0x588] sm:$0xff]
    %v254 = vld [vmem:[#allocation5 + $0x590] sm:$0xff]
    %v255 = vld [vmem:[#allocation5 + $0x598] sm:$0xff]
    %v256 = vld [vmem:[#allocation5 + $0x5a0] sm:$0xff]
    %v257 = vld [vmem:[#allocation5 + $0x5a8] sm:$0xff]
    %v258 = vld [vmem:[#allocation5 + $0x5b0] sm:$0xff]
    %v259 = vld [vmem:[#allocation5 + $0x5b8] sm:$0xff]
    %v260 = vld [vmem:[#allocation5 + $0x5c0] sm:$0xff]
    %v261 = vld [vmem:[#allocation5 + $0x5c8] sm:$0xff]
    %v262 = vld [vmem:[#allocation5 + $0x5d0] sm:$0xff]
    %v263 = vld [vmem:[#allocation5 + $0x5d8] sm:$0xff]
    %v264 = vld [vmem:[#allocation5 + $0x5e0] sm:$0xff]
    %v265 = vld [vmem:[#allocation5 + $0x5e8] sm:$0xff]
    %v266 = vld [vmem:[#allocation5 + $0x5f0] sm:$0xff]
    %v267 = vld [vmem:[#allocation5 + $0x5f8] sm:$0xff]
    %v268 = vld [vmem:[#allocation5 + $0x600] sm:$0xff]
    %v269 = vld [vmem:[#allocation5 + $0x608] sm:$0xff]
    %v270 = vld [vmem:[#allocation5 + $0x610] sm:$0xff]
    %v271 = vld [vmem:[#allocation5 + $0x618] sm:$0xff]
    %v272 = vld [vmem:[#allocation5 + $0x620] sm:$0xff]
    %v273 = vld [vmem:[#allocation5 + $0x628] sm:$0xff]
    %v274 = vld [vmem:[#allocation5 + $0x630] sm:$0xff]
    %v275 = vld [vmem:[#allocation5 + $0x638] sm:$0xff]
    %v276 = vld [vmem:[#allocation5 + $0x640] sm:$0xff]
    %v277 = vld [vmem:[#allocation5 + $0x648] sm:$0xff]
    %v278 = vld [vmem:[#allocation5 + $0x650] sm:$0xff]
    %v279 = vld [vmem:[#allocation5 + $0x658] sm:$0xff]
    %v280 = vld [vmem:[#allocation5 + $0x660] sm:$0xff]
    %v281 = vld [vmem:[#allocation5 + $0x668] sm:$0xff]
    %v282 = vld [vmem:[#allocation5 + $0x670] sm:$0xff]
    %v283 = vld [vmem:[#allocation5 + $0x678] sm:$0xff]
    %v284 = vld [vmem:[#allocation5 + $0x680] sm:$0xff]
    %v285 = vld [vmem:[#allocation5 + $0x688] sm:$0xff]
    %v286 = vld [vmem:[#allocation5 + $0x690] sm:$0xff]
    %v287 = vld [vmem:[#allocation5 + $0x698] sm:$0xff]
    %v288 = vld [vmem:[#allocation5 + $0x6a0] sm:$0xff]
    %v289 = vld [vmem:[#allocation5 + $0x6a8] sm:$0xff]
    %v290 = vld [vmem:[#allocation5 + $0x6b0] sm:$0xff]
    %v291 = vld [vmem:[#allocation5 + $0x6b8] sm:$0xff]
    %v292 = vld [vmem:[#allocation5 + $0x6c0] sm:$0xff]
    %v293 = vld [vmem:[#allocation5 + $0x6c8] sm:$0xff]
    %v294 = vld [vmem:[#allocation5 + $0x6d0] sm:$0xff]
    %v295 = vld [vmem:[#allocation5 + $0x6d8] sm:$0xff]
    %v296 = vld [vmem:[#allocation5 + $0x6e0] sm:$0xff]
    %v297 = vld [vmem:[#allocation5 + $0x6e8] sm:$0xff]
    %v298 = vld [vmem:[#allocation5 + $0x6f0] sm:$0xff]
    %v299 = vld [vmem:[#allocation5 + $0x6f8] sm:$0xff]
    %v300 = vld [vmem:[#allocation5 + $0x700] sm:$0xff]
    %v301 = vld [vmem:[#allocation5 + $0x708] sm:$0xff]
    %v302 = vld [vmem:[#allocation5 + $0x710] sm:$0xff]
    %v303 = vld [vmem:[#allocation5 + $0x718] sm:$0xff]
    %v304 = vld [vmem:[#allocation5 + $0x720] sm:$0xff]
    %v305 = vld [vmem:[#allocation5 + $0x728] sm:$0xff]
    %v306 = vld [vmem:[#allocation5 + $0x730] sm:$0xff]
    %v307 = vld [vmem:[#allocation5 + $0x738] sm:$0xff]
    %v308 = vld [vmem:[#allocation5 + $0x740] sm:$0xff]
    %v309 = vld [vmem:[#allocation5 + $0x748] sm:$0xff]
    %v310 = vld [vmem:[#allocation5 + $0x750] sm:$0xff]
    %v311 = vld [vmem:[#allocation5 + $0x758] sm:$0xff]
    %v312 = vld [vmem:[#allocation5 + $0x760] sm:$0xff]
    %v313 = vld [vmem:[#allocation5 + $0x768] sm:$0xff]
    %v314 = vld [vmem:[#allocation5 + $0x770] sm:$0xff]
    %v315 = vld [vmem:[#allocation5 + $0x778] sm:$0xff]
    %v316 = vld [vmem:[#allocation5 + $0x780] sm:$0xff]
    %v317 = vld [vmem:[#allocation5 + $0x788] sm:$0xff]
    %v318 = vld [vmem:[#allocation5 + $0x790] sm:$0xff]
    %v319 = vld [vmem:[#allocation5 + $0x798] sm:$0xff]
    %v320 = vld [vmem:[#allocation5 + $0x7a0] sm:$0xff]
    %v321 = vld [vmem:[#allocation5 + $0x7a8] sm:$0xff]
    %v322 = vld [vmem:[#allocation5 + $0x7b0] sm:$0xff]
    %v323 = vld [vmem:[#allocation5 + $0x7b8] sm:$0xff]
    %v324 = vld [vmem:[#allocation5 + $0x7c0] sm:$0xff]
    %v325 = vld [vmem:[#allocation5 + $0x7c8] sm:$0xff]
    %v326 = vld [vmem:[#allocation5 + $0x7d0] sm:$0xff]
    %v327 = vld [vmem:[#allocation5 + $0x7d8] sm:$0xff]
    %v328 = vld [vmem:[#allocation5 + $0x7e0] sm:$0xff]
    %v329 = vld [vmem:[#allocation5 + $0x7e8] sm:$0xff]
    %v330 = vld [vmem:[#allocation5 + $0x7f0] sm:$0xff]
    %v331 = vld [vmem:[#allocation5 + $0x7f8] sm:$0xff]
    %v332 = vld [vmem:[%s2] sm:$0x1]
    %v334 = vlaneseq
    %v335 = vshrl.u32 %v334, 7
    %v336 = vsub.s32 0, %v335
    %v337 = vrot.slane %v332, %v336
    %339 = vmatprep.subr.mxu0 0.0
    %340 = vmatpush1.msra.mxu0 %v76
    %341 = vmatprep.subr.mxu0 0.0
    %342 = vmatpush1.msra.mxu0 %v77
    %343 = vmatprep.subr.mxu0 0.0
    %344 = vmatpush1.msra.mxu0 %v78
    %345 = vmatprep.subr.mxu0 0.0
    %346 = vmatpush1.msra.mxu0 %v79
    %347 = vmatprep.subr.mxu0 0.0
    %348 = vmatpush1.msra.mxu0 %v80
    %349 = vmatprep.subr.mxu0 0.0
    %350 = vmatpush1.msra.mxu0 %v81
    %351 = vmatprep.subr.mxu0 0.0
    %352 = vmatpush1.msra.mxu0 %v82
    %353 = vmatprep.subr.mxu0 0.0
    %354 = vmatpush1.msra.mxu0 %v83
    %355 = vmatprep.subr.mxu0 0.0
    %356 = vmatpush1.msra.mxu0 %v84
    %357 = vmatprep.subr.mxu0 0.0
    %358 = vmatpush1.msra.mxu0 %v85
    %359 = vmatprep.subr.mxu0 0.0
    %360 = vmatpush1.msra.mxu0 %v86
    %361 = vmatprep.subr.mxu0 0.0
    %362 = vmatpush1.msra.mxu0 %v87
    %363 = vmatprep.subr.mxu0 0.0
    %364 = vmatpush1.msra.mxu0 %v88
    %365 = vmatprep.subr.mxu0 0.0
    %366 = vmatpush1.msra.mxu0 %v89
    %367 = vmatprep.subr.mxu0 0.0
    %368 = vmatpush1.msra.mxu0 %v90
    %369 = vmatprep.subr.mxu0 0.0
    %370 = vmatpush1.msra.mxu0 %v91
    %371 = vmatprep.subr.mxu0 0.0
    %372 = vmatpush1.msra.mxu0 %v92
    %373 = vmatprep.subr.mxu0 0.0
    %374 = vmatpush1.msra.mxu0 %v93
    %375 = vmatprep.subr.mxu0 0.0
    %376 = vmatpush1.msra.mxu0 %v94
    %377 = vmatprep.subr.mxu0 0.0
    %378 = vmatpush1.msra.mxu0 %v95
    %379 = vmatprep.subr.mxu0 0.0
    %380 = vmatpush1.msra.mxu0 %v96
    %381 = vmatprep.subr.mxu0 0.0
    %382 = vmatpush1.msra.mxu0 %v97
    %383 = vmatprep.subr.mxu0 0.0
    %384 = vmatpush1.msra.mxu0 %v98
    %385 = vmatprep.subr.mxu0 0.0
    %386 = vmatpush1.msra.mxu0 %v99
    %387 = vmatprep.subr.mxu0 0.0
    %388 = vmatpush1.msra.mxu0 %v100
    %389 = vmatprep.subr.mxu0 0.0
    %390 = vmatpush1.msra.mxu0 %v101
    %391 = vmatprep.subr.mxu0 0.0
    %392 = vmatpush1.msra.mxu0 %v102
    %393 = vmatprep.subr.mxu0 0.0
    %394 = vmatpush1.msra.mxu0 %v103
    %395 = vmatprep.subr.mxu0 0.0
    %396 = vmatpush1.msra.mxu0 %v104
    %397 = vmatprep.subr.mxu0 0.0
    %398 = vmatpush1.msra.mxu0 %v105
    %399 = vmatprep.subr.mxu0 0.0
    %400 = vmatpush1.msra.mxu0 %v106
    %401 = vmatprep.subr.mxu0 0.0
    %402 = vmatpush1.msra.mxu0 %v107
    %403 = vmatprep.mubr.f32.mxu0 %v61
    %404 = vmatmul.mubr.f32.gmra.mrb[0].mxu0 %v60
    %v405 = vpop.f32.mrb[0].mxu0
    %v406 = vadd.f32 %v337, %v405
    %v407 = vpop.f32.mrb[0].mxu0
    %408 = vdwg.mxu0
    %409 = vmatprep.subr.mxu0 0.0
    %410 = vmatpush1.msra.mxu0 %v108
    %411 = vmatprep.subr.mxu0 0.0
    %412 = vmatpush1.msra.mxu0 %v109
    %413 = vmatprep.subr.mxu0 0.0
    %414 = vmatpush1.msra.mxu0 %v110
    %415 = vmatprep.subr.mxu0 0.0
    %416 = vmatpush1.msra.mxu0 %v111
    %417 = vmatprep.subr.mxu0 0.0
    %418 = vmatpush1.msra.mxu0 %v112
    %419 = vmatprep.subr.mxu0 0.0
    %420 = vmatpush1.msra.mxu0 %v113
    %421 = vmatprep.subr.mxu0 0.0
    %422 = vmatpush1.msra.mxu0 %v114
    %423 = vmatprep.subr.mxu0 0.0
    %424 = vmatpush1.msra.mxu0 %v115
    %425 = vmatprep.subr.mxu0 0.0
    %426 = vmatpush1.msra.mxu0 %v116
    %427 = vmatprep.subr.mxu0 0.0
    %428 = vmatpush1.msra.mxu0 %v117
    %429 = vmatprep.subr.mxu0 0.0
    %430 = vmatpush1.msra.mxu0 %v118
    %431 = vmatprep.subr.mxu0 0.0
    %432 = vmatpush1.msra.mxu0 %v119
    %433 = vmatprep.subr.mxu0 0.0
    %434 = vmatpush1.msra.mxu0 %v120
    %435 = vmatprep.subr.mxu0 0.0
    %436 = vmatpush1.msra.mxu0 %v121
    %437 = vmatprep.subr.mxu0 0.0
    %438 = vmatpush1.msra.mxu0 %v122
    %439 = vmatprep.subr.mxu0 0.0
    %440 = vmatpush1.msra.mxu0 %v123
    %441 = vmatprep.subr.mxu0 0.0
    %442 = vmatpush1.msra.mxu0 %v124
    %443 = vmatprep.subr.mxu0 0.0
    %444 = vmatpush1.msra.mxu0 %v125
    %445 = vmatprep.subr.mxu0 0.0
    %446 = vmatpush1.msra.mxu0 %v126
    %447 = vmatprep.subr.mxu0 0.0
    %448 = vmatpush1.msra.mxu0 %v127
    %449 = vmatprep.subr.mxu0 0.0
    %450 = vmatpush1.msra.mxu0 %v128
    %451 = vmatprep.subr.mxu0 0.0
    %452 = vmatpush1.msra.mxu0 %v129
    %453 = vmatprep.subr.mxu0 0.0
    %454 = vmatpush1.msra.mxu0 %v130
    %455 = vmatprep.subr.mxu0 0.0
    %456 = vmatpush1.msra.mxu0 %v131
    %457 = vmatprep.subr.mxu0 0.0
    %458 = vmatpush1.msra.mxu0 %v132
    %459 = vmatprep.subr.mxu0 0.0
    %460 = vmatpush1.msra.mxu0 %v133
    %461 = vmatprep.subr.mxu0 0.0
    %462 = vmatpush1.msra.mxu0 %v134
    %463 = vmatprep.subr.mxu0 0.0
    %464 = vmatpush1.msra.mxu0 %v135
    %465 = vmatprep.subr.mxu0 0.0
    %466 = vmatpush1.msra.mxu0 %v136
    %467 = vmatprep.subr.mxu0 0.0
    %468 = vmatpush1.msra.mxu0 %v137
    %469 = vmatprep.subr.mxu0 0.0
    %470 = vmatpush1.msra.mxu0 %v138
    %471 = vmatprep.subr.mxu0 0.0
    %472 = vmatpush1.msra.mxu0 %v139
    %473 = vmatprep.mubr.f32.mxu0 %v63
    %474 = vmatmul.mubr.f32.gmra.mrb[0].mxu0 %v62
    %v475 = vpop.f32.mrb[0].mxu0
    %v476 = vadd.f32 %v406, %v475
    %v477 = vpop.f32.mrb[0].mxu0
    %478 = vdwg.mxu0
    %479 = vmatprep.subr.mxu0 0.0
    %480 = vmatpush1.msra.mxu0 %v140
    %481 = vmatprep.subr.mxu0 0.0
    %482 = vmatpush1.msra.mxu0 %v141
    %483 = vmatprep.subr.mxu0 0.0
    %484 = vmatpush1.msra.mxu0 %v142
    %485 = vmatprep.subr.mxu0 0.0
    %486 = vmatpush1.msra.mxu0 %v143
    %487 = vmatprep.subr.mxu0 0.0
    %488 = vmatpush1.msra.mxu0 %v144
    %489 = vmatprep.subr.mxu0 0.0
    %490 = vmatpush1.msra.mxu0 %v145
    %491 = vmatprep.subr.mxu0 0.0
    %492 = vmatpush1.msra.mxu0 %v146
    %493 = vmatprep.subr.mxu0 0.0
    %494 = vmatpush1.msra.mxu0 %v147
    %495 = vmatprep.subr.mxu0 0.0
    %496 = vmatpush1.msra.mxu0 %v148
    %497 = vmatprep.subr.mxu0 0.0
    %498 = vmatpush1.msra.mxu0 %v149
    %499 = vmatprep.subr.mxu0 0.0
    %500 = vmatpush1.msra.mxu0 %v150
    %501 = vmatprep.subr.mxu0 0.0
    %502 = vmatpush1.msra.mxu0 %v151
    %503 = vmatprep.subr.mxu0 0.0
    %504 = vmatpush1.msra.mxu0 %v152
    %505 = vmatprep.subr.mxu0 0.0
    %506 = vmatpush1.msra.mxu0 %v153
    %507 = vmatprep.subr.mxu0 0.0
    %508 = vmatpush1.msra.mxu0 %v154
    %509 = vmatprep.subr.mxu0 0.0
    %510 = vmatpush1.msra.mxu0 %v155
    %511 = vmatprep.subr.mxu0 0.0
    %512 = vmatpush1.msra.mxu0 %v156
    %513 = vmatprep.subr.mxu0 0.0
    %514 = vmatpush1.msra.mxu0 %v157
    %515 = vmatprep.subr.mxu0 0.0
    %516 = vmatpush1.msra.mxu0 %v158
    %517 = vmatprep.subr.mxu0 0.0
    %518 = vmatpush1.msra.mxu0 %v159
    %519 = vmatprep.subr.mxu0 0.0
    %520 = vmatpush1.msra.mxu0 %v160
    %521 = vmatprep.subr.mxu0 0.0
    %522 = vmatpush1.msra.mxu0 %v161
    %523 = vmatprep.subr.mxu0 0.0
    %524 = vmatpush1.msra.mxu0 %v162
    %525 = vmatprep.subr.mxu0 0.0
    %526 = vmatpush1.msra.mxu0 %v163
    %527 = vmatprep.subr.mxu0 0.0
    %528 = vmatpush1.msra.mxu0 %v164
    %529 = vmatprep.subr.mxu0 0.0
    %530 = vmatpush1.msra.mxu0 %v165
    %531 = vmatprep.subr.mxu0 0.0
    %532 = vmatpush1.msra.mxu0 %v166
    %533 = vmatprep.subr.mxu0 0.0
    %534 = vmatpush1.msra.mxu0 %v167
    %535 = vmatprep.subr.mxu0 0.0
    %536 = vmatpush1.msra.mxu0 %v168
    %537 = vmatprep.subr.mxu0 0.0
    %538 = vmatpush1.msra.mxu0 %v169
    %539 = vmatprep.subr.mxu0 0.0
    %540 = vmatpush1.msra.mxu0 %v170
    %541 = vmatprep.subr.mxu0 0.0
    %542 = vmatpush1.msra.mxu0 %v171
    %543 = vmatprep.mubr.f32.mxu0 %v65
    %544 = vmatmul.mubr.f32.gmra.mrb[0].mxu0 %v64
    %v545 = vpop.f32.mrb[0].mxu0
    %v546 = vadd.f32 %v476, %v545
    %v547 = vpop.f32.mrb[0].mxu0
    %548 = vdwg.mxu0
    %549 = vmatprep.subr.mxu0 0.0
    %550 = vmatpush1.msra.mxu0 %v172
    %551 = vmatprep.subr.mxu0 0.0
    %552 = vmatpush1.msra.mxu0 %v173
    %553 = vmatprep.subr.mxu0 0.0
    %554 = vmatpush1.msra.mxu0 %v174
    %555 = vmatprep.subr.mxu0 0.0
    %556 = vmatpush1.msra.mxu0 %v175
    %557 = vmatprep.subr.mxu0 0.0
    %558 = vmatpush1.msra.mxu0 %v176
    %559 = vmatprep.subr.mxu0 0.0
    %560 = vmatpush1.msra.mxu0 %v177
    %561 = vmatprep.subr.mxu0 0.0
    %562 = vmatpush1.msra.mxu0 %v178
    %563 = vmatprep.subr.mxu0 0.0
    %564 = vmatpush1.msra.mxu0 %v179
    %565 = vmatprep.subr.mxu0 0.0
    %566 = vmatpush1.msra.mxu0 %v180
    %567 = vmatprep.subr.mxu0 0.0
    %568 = vmatpush1.msra.mxu0 %v181
    %569 = vmatprep.subr.mxu0 0.0
    %570 = vmatpush1.msra.mxu0 %v182
    %571 = vmatprep.subr.mxu0 0.0
    %572 = vmatpush1.msra.mxu0 %v183
    %573 = vmatprep.subr.mxu0 0.0
    %574 = vmatpush1.msra.mxu0 %v184
    %575 = vmatprep.subr.mxu0 0.0
    %576 = vmatpush1.msra.mxu0 %v185
    %577 = vmatprep.subr.mxu0 0.0
    %578 = vmatpush1.msra.mxu0 %v186
    %579 = vmatprep.subr.mxu0 0.0
    %580 = vmatpush1.msra.mxu0 %v187
    %581 = vmatprep.subr.mxu0 0.0
    %582 = vmatpush1.msra.mxu0 %v188
    %583 = vmatprep.subr.mxu0 0.0
    %584 = vmatpush1.msra.mxu0 %v189
    %585 = vmatprep.subr.mxu0 0.0
    %586 = vmatpush1.msra.mxu0 %v190
    %587 = vmatprep.subr.mxu0 0.0
    %588 = vmatpush1.msra.mxu0 %v191
    %589 = vmatprep.subr.mxu0 0.0
    %590 = vmatpush1.msra.mxu0 %v192
    %591 = vmatprep.subr.mxu0 0.0
    %592 = vmatpush1.msra.mxu0 %v193
    %593 = vmatprep.subr.mxu0 0.0
    %594 = vmatpush1.msra.mxu0 %v194
    %595 = vmatprep.subr.mxu0 0.0
    %596 = vmatpush1.msra.mxu0 %v195
    %597 = vmatprep.subr.mxu0 0.0
    %598 = vmatpush1.msra.mxu0 %v196
    %599 = vmatprep.subr.mxu0 0.0
    %600 = vmatpush1.msra.mxu0 %v197
    %601 = vmatprep.subr.mxu0 0.0
    %602 = vmatpush1.msra.mxu0 %v198
    %603 = vmatprep.subr.mxu0 0.0
    %604 = vmatpush1.msra.mxu0 %v199
    %605 = vmatprep.subr.mxu0 0.0
    %606 = vmatpush1.msra.mxu0 %v200
    %607 = vmatprep.subr.mxu0 0.0
    %608 = vmatpush1.msra.mxu0 %v201
    %609 = vmatprep.subr.mxu0 0.0
    %610 = vmatpush1.msra.mxu0 %v202
    %611 = vmatprep.subr.mxu0 0.0
    %612 = vmatpush1.msra.mxu0 %v203
    %613 = vmatprep.mubr.f32.mxu0 %v67
    %614 = vmatmul.mubr.f32.gmra.mrb[0].mxu0 %v66
    %v615 = vpop.f32.mrb[0].mxu0
    %v616 = vadd.f32 %v546, %v615
    %v617 = vpop.f32.mrb[0].mxu0
    %618 = vdwg.mxu0
    %619 = vmatprep.subr.mxu0 0.0
    %620 = vmatpush1.msra.mxu0 %v204
    %621 = vmatprep.subr.mxu0 0.0
    %622 = vmatpush1.msra.mxu0 %v205
    %623 = vmatprep.subr.mxu0 0.0
    %624 = vmatpush1.msra.mxu0 %v206
    %625 = vmatprep.subr.mxu0 0.0
    %626 = vmatpush1.msra.mxu0 %v207
    %627 = vmatprep.subr.mxu0 0.0
    %628 = vmatpush1.msra.mxu0 %v208
    %629 = vmatprep.subr.mxu0 0.0
    %630 = vmatpush1.msra.mxu0 %v209
    %631 = vmatprep.subr.mxu0 0.0
    %632 = vmatpush1.msra.mxu0 %v210
    %633 = vmatprep.subr.mxu0 0.0
    %634 = vmatpush1.msra.mxu0 %v211
    %635 = vmatprep.subr.mxu0 0.0
    %636 = vmatpush1.msra.mxu0 %v212
    %637 = vmatprep.subr.mxu0 0.0
    %638 = vmatpush1.msra.mxu0 %v213
    %639 = vmatprep.subr.mxu0 0.0
    %640 = vmatpush1.msra.mxu0 %v214
    %641 = vmatprep.subr.mxu0 0.0
    %642 = vmatpush1.msra.mxu0 %v215
    %643 = vmatprep.subr.mxu0 0.0
    %644 = vmatpush1.msra.mxu0 %v216
    %645 = vmatprep.subr.mxu0 0.0
    %646 = vmatpush1.msra.mxu0 %v217
    %647 = vmatprep.subr.mxu0 0.0
    %648 = vmatpush1.msra.mxu0 %v218
    %649 = vmatprep.subr.mxu0 0.0
    %650 = vmatpush1.msra.mxu0 %v219
    %651 = vmatprep.subr.mxu0 0.0
    %652 = vmatpush1.msra.mxu0 %v220
    %653 = vmatprep.subr.mxu0 0.0
    %654 = vmatpush1.msra.mxu0 %v221
    %655 = vmatprep.subr.mxu0 0.0
    %656 = vmatpush1.msra.mxu0 %v222
    %657 = vmatprep.subr.mxu0 0.0
    %658 = vmatpush1.msra.mxu0 %v223
    %659 = vmatprep.subr.mxu0 0.0
    %660 = vmatpush1.msra.mxu0 %v224
    %661 = vmatprep.subr.mxu0 0.0
    %662 = vmatpush1.msra.mxu0 %v225
    %663 = vmatprep.subr.mxu0 0.0
    %664 = vmatpush1.msra.mxu0 %v226
    %665 = vmatprep.subr.mxu0 0.0
    %666 = vmatpush1.msra.mxu0 %v227
    %667 = vmatprep.subr.mxu0 0.0
    %668 = vmatpush1.msra.mxu0 %v228
    %669 = vmatprep.subr.mxu0 0.0
    %670 = vmatpush1.msra.mxu0 %v229
    %671 = vmatprep.subr.mxu0 0.0
    %672 = vmatpush1.msra.mxu0 %v230
    %673 = vmatprep.subr.mxu0 0.0
    %674 = vmatpush1.msra.mxu0 %v231
    %675 = vmatprep.subr.mxu0 0.0
    %676 = vmatpush1.msra.mxu0 %v232
    %677 = vmatprep.subr.mxu0 0.0
    %678 = vmatpush1.msra.mxu0 %v233
    %679 = vmatprep.subr.mxu0 0.0
    %680 = vmatpush1.msra.mxu0 %v234
    %681 = vmatprep.subr.mxu0 0.0
    %682 = vmatpush1.msra.mxu0 %v235
    %683 = vmatprep.mubr.f32.mxu0 %v69
    %684 = vmatmul.mubr.f32.gmra.mrb[0].mxu0 %v68
    %v685 = vpop.f32.mrb[0].mxu0
    %v686 = vadd.f32 %v616, %v685
    %v687 = vpop.f32.mrb[0].mxu0
    %688 = vdwg.mxu0
    %689 = vmatprep.subr.mxu0 0.0
    %690 = vmatpush1.msra.mxu0 %v236
    %691 = vmatprep.subr.mxu0 0.0
    %692 = vmatpush1.msra.mxu0 %v237
    %693 = vmatprep.subr.mxu0 0.0
    %694 = vmatpush1.msra.mxu0 %v238
    %695 = vmatprep.subr.mxu0 0.0
    %696 = vmatpush1.msra.mxu0 %v239
    %697 = vmatprep.subr.mxu0 0.0
    %698 = vmatpush1.msra.mxu0 %v240
    %699 = vmatprep.subr.mxu0 0.0
    %700 = vmatpush1.msra.mxu0 %v241
    %701 = vmatprep.subr.mxu0 0.0
    %702 = vmatpush1.msra.mxu0 %v242
    %703 = vmatprep.subr.mxu0 0.0
    %704 = vmatpush1.msra.mxu0 %v243
    %705 = vmatprep.subr.mxu0 0.0
    %706 = vmatpush1.msra.mxu0 %v244
    %707 = vmatprep.subr.mxu0 0.0
    %708 = vmatpush1.msra.mxu0 %v245
    %709 = vmatprep.subr.mxu0 0.0
    %710 = vmatpush1.msra.mxu0 %v246
    %711 = vmatprep.subr.mxu0 0.0
    %712 = vmatpush1.msra.mxu0 %v247
    %713 = vmatprep.subr.mxu0 0.0
    %714 = vmatpush1.msra.mxu0 %v248
    %715 = vmatprep.subr.mxu0 0.0
    %716 = vmatpush1.msra.mxu0 %v249
    %717 = vmatprep.subr.mxu0 0.0
    %718 = vmatpush1.msra.mxu0 %v250
    %719 = vmatprep.subr.mxu0 0.0
    %720 = vmatpush1.msra.mxu0 %v251
    %721 = vmatprep.subr.mxu0 0.0
    %722 = vmatpush1.msra.mxu0 %v252
    %723 = vmatprep.subr.mxu0 0.0
    %724 = vmatpush1.msra.mxu0 %v253
    %725 = vmatprep.subr.mxu0 0.0
    %726 = vmatpush1.msra.mxu0 %v254
    %727 = vmatprep.subr.mxu0 0.0
    %728 = vmatpush1.msra.mxu0 %v255
    %729 = vmatprep.subr.mxu0 0.0
    %730 = vmatpush1.msra.mxu0 %v256
    %731 = vmatprep.subr.mxu0 0.0
    %732 = vmatpush1.msra.mxu0 %v257
    %733 = vmatprep.subr.mxu0 0.0
    %734 = vmatpush1.msra.mxu0 %v258
    %735 = vmatprep.subr.mxu0 0.0
    %736 = vmatpush1.msra.mxu0 %v259
    %737 = vmatprep.subr.mxu0 0.0
    %738 = vmatpush1.msra.mxu0 %v260
    %739 = vmatprep.subr.mxu0 0.0
    %740 = vmatpush1.msra.mxu0 %v261
    %741 = vmatprep.subr.mxu0 0.0
    %742 = vmatpush1.msra.mxu0 %v262
    %743 = vmatprep.subr.mxu0 0.0
    %744 = vmatpush1.msra.mxu0 %v263
    %745 = vmatprep.subr.mxu0 0.0
    %746 = vmatpush1.msra.mxu0 %v264
    %747 = vmatprep.subr.mxu0 0.0
    %748 = vmatpush1.msra.mxu0 %v265
    %749 = vmatprep.subr.mxu0 0.0
    %750 = vmatpush1.msra.mxu0 %v266
    %751 = vmatprep.subr.mxu0 0.0
    %752 = vmatpush1.msra.mxu0 %v267
    %753 = vmatprep.mubr.f32.mxu0 %v71
    %754 = vmatmul.mubr.f32.gmra.mrb[0].mxu0 %v70
    %v755 = vpop.f32.mrb[0].mxu0
    %v756 = vadd.f32 %v686, %v755
    %v757 = vpop.f32.mrb[0].mxu0
    %758 = vdwg.mxu0
    %759 = vmatprep.subr.mxu0 0.0
    %760 = vmatpush1.msra.mxu0 %v268
    %761 = vmatprep.subr.mxu0 0.0
    %762 = vmatpush1.msra.mxu0 %v269
    %763 = vmatprep.subr.mxu0 0.0
    %764 = vmatpush1.msra.mxu0 %v270
    %765 = vmatprep.subr.mxu0 0.0
    %766 = vmatpush1.msra.mxu0 %v271
    %767 = vmatprep.subr.mxu0 0.0
    %768 = vmatpush1.msra.mxu0 %v272
    %769 = vmatprep.subr.mxu0 0.0
    %770 = vmatpush1.msra.mxu0 %v273
    %771 = vmatprep.subr.mxu0 0.0
    %772 = vmatpush1.msra.mxu0 %v274
    %773 = vmatprep.subr.mxu0 0.0
    %774 = vmatpush1.msra.mxu0 %v275
    %775 = vmatprep.subr.mxu0 0.0
    %776 = vmatpush1.msra.mxu0 %v276
    %777 = vmatprep.subr.mxu0 0.0
    %778 = vmatpush1.msra.mxu0 %v277
    %779 = vmatprep.subr.mxu0 0.0
    %780 = vmatpush1.msra.mxu0 %v278
    %781 = vmatprep.subr.mxu0 0.0
    %782 = vmatpush1.msra.mxu0 %v279
    %783 = vmatprep.subr.mxu0 0.0
    %784 = vmatpush1.msra.mxu0 %v280
    %785 = vmatprep.subr.mxu0 0.0
    %786 = vmatpush1.msra.mxu0 %v281
    %787 = vmatprep.subr.mxu0 0.0
    %788 = vmatpush1.msra.mxu0 %v282
    %789 = vmatprep.subr.mxu0 0.0
    %790 = vmatpush1.msra.mxu0 %v283
    %791 = vmatprep.subr.mxu0 0.0
    %792 = vmatpush1.msra.mxu0 %v284
    %793 = vmatprep.subr.mxu0 0.0
    %794 = vmatpush1.msra.mxu0 %v285
    %795 = vmatprep.subr.mxu0 0.0
    %796 = vmatpush1.msra.mxu0 %v286
    %797 = vmatprep.subr.mxu0 0.0
    %798 = vmatpush1.msra.mxu0 %v287
    %799 = vmatprep.subr.mxu0 0.0
    %800 = vmatpush1.msra.mxu0 %v288
    %801 = vmatprep.subr.mxu0 0.0
    %802 = vmatpush1.msra.mxu0 %v289
    %803 = vmatprep.subr.mxu0 0.0
    %804 = vmatpush1.msra.mxu0 %v290
    %805 = vmatprep.subr.mxu0 0.0
    %806 = vmatpush1.msra.mxu0 %v291
    %807 = vmatprep.subr.mxu0 0.0
    %808 = vmatpush1.msra.mxu0 %v292
    %809 = vmatprep.subr.mxu0 0.0
    %810 = vmatpush1.msra.mxu0 %v293
    %811 = vmatprep.subr.mxu0 0.0
    %812 = vmatpush1.msra.mxu0 %v294
    %813 = vmatprep.subr.mxu0 0.0
    %814 = vmatpush1.msra.mxu0 %v295
    %815 = vmatprep.subr.mxu0 0.0
    %816 = vmatpush1.msra.mxu0 %v296
    %817 = vmatprep.subr.mxu0 0.0
    %818 = vmatpush1.msra.mxu0 %v297
    %819 = vmatprep.subr.mxu0 0.0
    %820 = vmatpush1.msra.mxu0 %v298
    %821 = vmatprep.subr.mxu0 0.0
    %822 = vmatpush1.msra.mxu0 %v299
    %823 = vmatprep.mubr.f32.mxu0 %v73
    %824 = vmatmul.mubr.f32.gmra.mrb[0].mxu0 %v72
    %v825 = vpop.f32.mrb[0].mxu0
    %v826 = vadd.f32 %v756, %v825
    %v827 = vpop.f32.mrb[0].mxu0
    %828 = vdwg.mxu0
    %829 = vmatprep.subr.mxu0 0.0
    %830 = vmatpush1.msra.mxu0 %v300
    %831 = vmatprep.subr.mxu0 0.0
    %832 = vmatpush1.msra.mxu0 %v301
    %833 = vmatprep.subr.mxu0 0.0
    %834 = vmatpush1.msra.mxu0 %v302
    %835 = vmatprep.subr.mxu0 0.0
    %836 = vmatpush1.msra.mxu0 %v303
    %837 = vmatprep.subr.mxu0 0.0
    %838 = vmatpush1.msra.mxu0 %v304
    %839 = vmatprep.subr.mxu0 0.0
    %840 = vmatpush1.msra.mxu0 %v305
    %841 = vmatprep.subr.mxu0 0.0
    %842 = vmatpush1.msra.mxu0 %v306
    %843 = vmatprep.subr.mxu0 0.0
    %844 = vmatpush1.msra.mxu0 %v307
    %845 = vmatprep.subr.mxu0 0.0
    %846 = vmatpush1.msra.mxu0 %v308
    %847 = vmatprep.subr.mxu0 0.0
    %848 = vmatpush1.msra.mxu0 %v309
    %849 = vmatprep.subr.mxu0 0.0
    %850 = vmatpush1.msra.mxu0 %v310
    %851 = vmatprep.subr.mxu0 0.0
    %852 = vmatpush1.msra.mxu0 %v311
    %853 = vmatprep.subr.mxu0 0.0
    %854 = vmatpush1.msra.mxu0 %v312
    %855 = vmatprep.subr.mxu0 0.0
    %856 = vmatpush1.msra.mxu0 %v313
    %857 = vmatprep.subr.mxu0 0.0
    %858 = vmatpush1.msra.mxu0 %v314
    %859 = vmatprep.subr.mxu0 0.0
    %860 = vmatpush1.msra.mxu0 %v315
    %861 = vmatprep.subr.mxu0 0.0
    %862 = vmatpush1.msra.mxu0 %v316
    %863 = vmatprep.subr.mxu0 0.0
    %864 = vmatpush1.msra.mxu0 %v317
    %865 = vmatprep.subr.mxu0 0.0
    %866 = vmatpush1.msra.mxu0 %v318
    %867 = vmatprep.subr.mxu0 0.0
    %868 = vmatpush1.msra.mxu0 %v319
    %869 = vmatprep.subr.mxu0 0.0
    %870 = vmatpush1.msra.mxu0 %v320
    %871 = vmatprep.subr.mxu0 0.0
    %872 = vmatpush1.msra.mxu0 %v321
    %873 = vmatprep.subr.mxu0 0.0
    %874 = vmatpush1.msra.mxu0 %v322
    %875 = vmatprep.subr.mxu0 0.0
    %876 = vmatpush1.msra.mxu0 %v323
    %877 = vmatprep.subr.mxu0 0.0
    %878 = vmatpush1.msra.mxu0 %v324
    %879 = vmatprep.subr.mxu0 0.0
    %880 = vmatpush1.msra.mxu0 %v325
    %881 = vmatprep.subr.mxu0 0.0
    %882 = vmatpush1.msra.mxu0 %v326
    %883 = vmatprep.subr.mxu0 0.0
    %884 = vmatpush1.msra.mxu0 %v327
    %885 = vmatprep.subr.mxu0 0.0
    %886 = vmatpush1.msra.mxu0 %v328
    %887 = vmatprep.subr.mxu0 0.0
    %888 = vmatpush1.msra.mxu0 %v329
    %889 = vmatprep.subr.mxu0 0.0
    %890 = vmatpush1.msra.mxu0 %v330
    %891 = vmatprep.subr.mxu0 0.0
    %892 = vmatpush1.msra.mxu0 %v331
    %893 = vmatprep.mubr.f32.mxu0 %v75
    %894 = vmatmul.mubr.f32.gmra.mrb[0].mxu0 %v74
    %v895 = vpop.f32.mrb[0].mxu0
    %v896 = vadd.f32 %v826, %v895
    %v897 = vpop.f32.mrb[0].mxu0
    %898 = vdwg.mxu0
    %vm899 = vcmp.gt.f32.partialorder %v896, 0.0
    %v900 = vmul.f32 %v896, 0.01
    %v901 = vsel %vm899, %v896, %v900
    %v902 = vld [vmem:[#allocation7] sm:$0xff]
    %v903 = vld [vmem:[#allocation7 + $0x8] sm:$0xff]
    %v904 = vld [vmem:[#allocation7 + $0x10] sm:$0xff]
    %v905 = vld [vmem:[#allocation7 + $0x18] sm:$0xff]
    %v906 = vld [vmem:[#allocation7 + $0x20] sm:$0xff]
    %v907 = vld [vmem:[#allocation7 + $0x28] sm:$0xff]
    %v908 = vld [vmem:[#allocation7 + $0x30] sm:$0xff]
    %v909 = vld [vmem:[#allocation7 + $0x38] sm:$0xff]
    %v910 = vld [vmem:[#allocation7 + $0x40] sm:$0xff]
    %v911 = vld [vmem:[#allocation7 + $0x48] sm:$0xff]
    %v912 = vld [vmem:[#allocation7 + $0x50] sm:$0xff]
    %v913 = vld [vmem:[#allocation7 + $0x58] sm:$0xff]
    %v914 = vld [vmem:[#allocation7 + $0x60] sm:$0xff]
    %v915 = vld [vmem:[#allocation7 + $0x68] sm:$0xff]
    %v916 = vld [vmem:[#allocation7 + $0x70] sm:$0xff]
    %v917 = vld [vmem:[#allocation7 + $0x78] sm:$0xff]
    %v918 = vld [vmem:[%s4] sm:$0x1]
    %v920 = vlaneseq
    %v921 = vshrl.u32 %v920, 7
    %v922 = vsub.s32 0, %v921
    %v923 = vrot.slane %v918, %v922
    %925 = vmatprep.subr.mxu0 0.0
    %926 = vmatpush1.msra.mxu0 %v902
    %927 = vmatprep.subr.mxu0 0.0
    %928 = vmatpush1.msra.mxu0 %v903
    %929 = vmatprep.subr.mxu0 0.0
    %930 = vmatpush1.msra.mxu0 %v904
    %931 = vmatprep.subr.mxu0 0.0
    %932 = vmatpush1.msra.mxu0 %v905
    %933 = vmatprep.subr.mxu0 0.0
    %934 = vmatpush1.msra.mxu0 %v906
    %935 = vmatprep.subr.mxu0 0.0
    %936 = vmatpush1.msra.mxu0 %v907
    %937 = vmatprep.subr.mxu0 0.0
    %938 = vmatpush1.msra.mxu0 %v908
    %939 = vmatprep.subr.mxu0 0.0
    %940 = vmatpush1.msra.mxu0 %v909
    %941 = vmatprep.subr.mxu0 0.0
    %942 = vmatpush1.msra.mxu0 %v910
    %943 = vmatprep.subr.mxu0 0.0
    %944 = vmatpush1.msra.mxu0 %v911
    %945 = vmatprep.subr.mxu0 0.0
    %946 = vmatpush1.msra.mxu0 %v912
    %947 = vmatprep.subr.mxu0 0.0
    %948 = vmatpush1.msra.mxu0 %v913
    %949 = vmatprep.subr.mxu0 0.0
    %950 = vmatpush1.msra.mxu0 %v914
    %951 = vmatprep.subr.mxu0 0.0
    %952 = vmatpush1.msra.mxu0 %v915
    %953 = vmatprep.subr.mxu0 0.0
    %954 = vmatpush1.msra.mxu0 %v916
    %955 = vmatprep.subr.mxu0 0.0
    %956 = vmatpush1.msra.mxu0 %v917
    %957 = vmatprep.subr.mxu0 0.0
    %958 = vmatpush1.msra.mxu0 0.0
    %959 = vmatprep.subr.mxu0 0.0
    %960 = vmatpush1.msra.mxu0 0.0
    %961 = vmatprep.subr.mxu0 0.0
    %962 = vmatpush1.msra.mxu0 0.0
    %963 = vmatprep.subr.mxu0 0.0
    %964 = vmatpush1.msra.mxu0 0.0
    %965 = vmatprep.subr.mxu0 0.0
    %966 = vmatpush1.msra.mxu0 0.0
    %967 = vmatprep.subr.mxu0 0.0
    %968 = vmatpush1.msra.mxu0 0.0
    %969 = vmatprep.subr.mxu0 0.0
    %970 = vmatpush1.msra.mxu0 0.0
    %971 = vmatprep.subr.mxu0 0.0
    %972 = vmatpush1.msra.mxu0 0.0
    %973 = vmatprep.subr.mxu0 0.0
    %974 = vmatpush1.msra.mxu0 0.0
    %975 = vmatprep.subr.mxu0 0.0
    %976 = vmatpush1.msra.mxu0 0.0
    %977 = vmatprep.subr.mxu0 0.0
    %978 = vmatpush1.msra.mxu0 0.0
    %979 = vmatprep.subr.mxu0 0.0
    %980 = vmatpush1.msra.mxu0 0.0
    %981 = vmatprep.subr.mxu0 0.0
    %982 = vmatpush1.msra.mxu0 0.0
    %983 = vmatprep.subr.mxu0 0.0
    %984 = vmatpush1.msra.mxu0 0.0
    %985 = vmatprep.subr.mxu0 0.0
    %986 = vmatpush1.msra.mxu0 0.0
    %987 = vmatprep.subr.mxu0 0.0
    %988 = vmatpush1.msra.mxu0 0.0
    %989 = vmatprep.mubr.f32.mxu0 0.0
    %990 = vmatmul.mubr.f32.gmra.mrb[0].mxu0 %v901
    %v991 = vpop.f32.mrb[0].mxu0
    %v992 = vadd.f32 %v923, %v991
    %v993 = vpop.f32.mrb[0].mxu0
    %994 = vdwg.mxu0
    %995 = vst [vmem:[#allocation8] sm:$0xff] %v992
    // Predicated region
    $region34: #{tpu_custom_call.1} parent=1 // pred_check
      _
    $region35: #{tpu_custom_call.1} parent=1 // pred_check_branch
      %997 = sbr.rel (0) target = $region37
    $region36: #{tpu_custom_call.1} parent=1 // pred_region
      %s999 = ssub.s32 128, 128
      %1000 = vsyncadd [#allocation4], %s999
      %s1002 = sshll.u32 [#allocation8], 4
      %s1003 = int_to_ptr.vmem [resolvable:$true] %s1002
      %1005 = dma.vmem_to_hbm [thread:$0]  %s1003, 128, %s5, [#allocation4]
    $region37: #{tpu_custom_call.1} parent=1 // pred_fallthru
      _
    // Predicated region
    $region38: #{tpu_custom_call.1} parent=1 // pred_check
      _
    $region39: #{tpu_custom_call.1} parent=1 // pred_check_branch
      %1007 = sbr.rel (0) target = $region41
    $region40: #{tpu_custom_call.1} parent=1 // pred_region
      %1008 = dma.done [#allocation4], 128
    $region41: #{tpu_custom_call.1} parent=1 // pred_fallthru
      _
    %1009 = vsyncpa [#allocation3], 1
    %1010 = vsyncpa [#allocation6], 1
    %1011 = vsyncpa [#allocation4], 1

</llo_original>
